<compile_context>
chip_gen: v7x
topology: tpu7x:2x2x1
jax: 0.10.0
libtpu: 0.0.40
codegen_flags: <defaults>
</compile_context>

<pallas_src>
import math

import jax
import jax.numpy as jnp
from jax import lax
from jax.experimental import pallas as pl
from jax.experimental.pallas import tpu as pltpu

_LN_EPS = 1e-5  # PyTorch nn.LayerNorm default


def _round_up(a, m):
    return (a + m - 1) // m * m


def _make_kernel(th, wo, gh, gw, kg, e_pad, inv_e, out_dtype):
    """Fused grouped-conv matmul + LayerNorm for one block of th*wo output rows.

    xs_ref   : (1, th+gh-1, Ws, kg)  bf16  space-to-depth input window (with halo)
    w_ref    : (gh*gw, kg, e_pad)    bf16  per-shift-group conv weight (resident)
    b_ref    : (1, e_pad)            f32   conv bias
    g_ref    : (1, e_pad)            f32   LN gamma
    beta_ref : (1, e_pad)            f32   LN beta
    mask_ref : (1, e_pad)            f32   1 on real embed columns, 0 on padding
    o_ref    : (1, th*wo, e_pad)     out_dtype
    """

    def kernel(xs_ref, w_ref, b_ref, g_ref, beta_ref, mask_ref, o_ref):
        y = None
        g = 0
        for gy in range(gh):
            for gx in range(gw):
                # Unstrided, statically-offset window of the space-to-depth block.
                lhs = xs_ref[0, gy:gy + th, gx:gx + wo, :].reshape(th * wo, kg)
                part = jnp.dot(lhs, w_ref[g],
                               preferred_element_type=jnp.float32)  # f32 MXU acc
                y = part if y is None else y + part
                g += 1
        y = y + b_ref[...]                                   # (th*wo, e_pad) f32

        # LayerNorm over the real embed columns.  Padded columns of y are exactly
        # zero (zero weight/bias columns), so the plain sum gives the true mean;
        # the resident 0/1 mask keeps the variance exact (review #9).
        mean = jnp.sum(y, axis=-1, keepdims=True) * inv_e
        c = y - mean
        var = jnp.sum(c * c * mask_ref[...], axis=-1, keepdims=True) * inv_e
        yn = c * lax.rsqrt(var + _LN_EPS)
        o_ref[0] = (yn * g_ref[...] + beta_ref[...]).astype(out_dtype)

    return kernel


def overlap_patch_embed(x, w, b, gamma, beta, *, stride, block_rows=2048,
                        out_dtype=jnp.bfloat16):
    """x: (B, C, H, W) NCHW.  w: (E, C, kh, kw) OIHW.

    Returns ((B, N, E), H_out, W_out) with N = H_out * W_out, matching the
    PyTorch `proj -> flatten(2).transpose(1,2) -> LayerNorm` forward.
    """
    B, C, H, W = x.shape
    E, Cw, kh, kw = w.shape
    assert C == Cw
    s = int(stride)
    ph, pw = kh // 2, kw // 2

    Ho = (H + 2 * ph - kh) // s + 1
    Wo = (W + 2 * pw - kw) // s + 1
    gh = -(-kh // s)                    # ceil(kh / s)
    gw = -(-kw // s)
    Kg = s * s * C                      # channels per shift group
    G = gh * gw
    E_pad = _round_up(E, 128)           # lane-dense output stores

    # ---- row-block (M-tile) selection (review #5 / #6) ----------------------
    th = max(1, min(Ho, block_rows // max(Wo, 1)))
    n_hblk = -(-Ho // th)
    if B * n_hblk < 2 and Ho >= 2:      # keep >= 2 grid steps for v7x megacore
        th = -(-Ho // 2)
        n_hblk = -(-Ho // th)
    Ho_pad = n_hblk * th

    # ---- wrapper glue: pad + space-to-depth (single ~input-sized pass; this
    # replaces the kh*kw*C im2col tensor of the previous version) -------------
    Hp = _round_up(H + 2 * ph, s)
    Wp = max(_round_up(W + 2 * pw, s), (Wo + gw - 1) * s)
    x_nhwc = jnp.transpose(x, (0, 2, 3, 1)).astype(jnp.bfloat16)      # (B,H,W,C)
    xp = jnp.pad(x_nhwc, ((0, 0), (ph, Hp - H - ph), (pw, Wp - W - pw), (0, 0)))
    Hs, Ws = Hp // s, Wp // s
    xs = xp.reshape(B, Hs, s, Ws, s, C)
    xs = jnp.transpose(xs, (0, 1, 3, 2, 4, 5)).reshape(B, Hs, Ws, Kg)
    # xs[b, p, q, (u*s+v)*C + c] == padded_input[b, p*s+u, q*s+v, c]

    # Make sure every row block (incl. the gh-1 halo rows) is in range, then cut
    # into per-block chunks.  Halo rows are duplicated; extra rows/cols are zero
    # and only ever meet zero weight rows, so they do not affect the result.
    Hs_need = Ho_pad + gh - 1
    if Hs < Hs_need:
        xs = jnp.pad(xs, ((0, 0), (0, Hs_need - Hs), (0, 0), (0, 0)))
    thg = th + gh - 1
    chunks = [lax.slice_in_dim(xs, j * th, j * th + thg, axis=1)
              for j in range(n_hblk)]
    xs_ch = jnp.stack(chunks, axis=1).reshape(B * n_hblk, thg, Ws, Kg)

    # ---- weight / bias / LN params re-packed per shift group ----------------
    # group (gy, gx), in-group channel (u*s+v)*C + c  <->  conv tap (gy*s+u, gx*s+v, c)
    w_sp = jnp.pad(w, ((0, 0), (0, 0), (0, gh * s - kh), (0, gw * s - kw)))
    w_sp = w_sp.reshape(E, C, gh, s, gw, s)
    w_sp = jnp.transpose(w_sp, (2, 4, 3, 5, 1, 0)).reshape(G, Kg, E)
    w_g = jnp.pad(w_sp.astype(jnp.bfloat16), ((0, 0), (0, 0), (0, E_pad - E)))

    def _row(v):
        return jnp.pad(v.astype(jnp.float32).reshape(1, E),
                       ((0, 0), (0, E_pad - E)))

    b2d, g2d, beta2d = _row(b), _row(gamma), _row(beta)
    mask = jnp.pad(jnp.ones((1, E), jnp.float32), ((0, 0), (0, E_pad - E)))

    kernel = _make_kernel(th, Wo, gh, gw, Kg, E_pad, 1.0 / float(E), out_dtype)

    out = pl.pallas_call(
        kernel,
        out_shape=jax.ShapeDtypeStruct((B * n_hblk, th * Wo, E_pad), out_dtype),
        grid_spec=pltpu.PrefetchScalarGridSpec(
            num_scalar_prefetch=0,
            grid=(B * n_hblk,),
            in_specs=[
                pl.BlockSpec((1, thg, Ws, Kg), lambda i: (i, 0, 0, 0)),   # streamed
                pl.BlockSpec((G, Kg, E_pad), lambda i: (0, 0, 0)),        # resident weight
                pl.BlockSpec((1, E_pad), lambda i: (0, 0)),               # conv bias
                pl.BlockSpec((1, E_pad), lambda i: (0, 0)),               # LN gamma
                pl.BlockSpec((1, E_pad), lambda i: (0, 0)),               # LN beta
                pl.BlockSpec((1, E_pad), lambda i: (0, 0)),               # LN column mask
            ],
            out_specs=pl.BlockSpec((1, th * Wo, E_pad), lambda i: (i, 0, 0)),
        ),
        compiler_params=pltpu.CompilerParams(
            dimension_semantics=("parallel",),   # shard M blocks across v7x's 2 TCs
            # review #4: no vmem_limit override; footprint << 32 MiB default.
        ),
    )(xs_ch, w_g, b2d, g2d, beta2d, mask)

    out = out.reshape(B, Ho_pad, Wo, E_pad)
    if Ho_pad != Ho:                       # crops only when padding was added
        out = out[:, :Ho]
    out = out.reshape(B, Ho * Wo, E_pad)
    if E_pad != E:
        out = out[..., :E]
    return out, Ho, Wo


def _reference(x, w, b, gamma, beta, *, stride, matmul_dtype=jnp.bfloat16):
    """Pure-JAX reference matching the PyTorch forward (conv operands cast to
    `matmul_dtype` so the comparison matches the kernel's MXU precision)."""
    E = w.shape[0]
    kh, kw = w.shape[2], w.shape[3]
    ph, pw = kh // 2, kw // 2
    y = lax.conv_general_dilated(
        x.astype(matmul_dtype), w.astype(matmul_dtype),
        window_strides=(stride, stride),
        padding=((ph, ph), (pw, pw)),
        dimension_numbers=("NCHW", "OIHW", "NCHW"),
        preferred_element_type=jnp.float32,
    ) + b.astype(jnp.float32)[None, :, None, None]
    B, _, Ho, Wo = y.shape
    yf = y.reshape(B, E, Ho * Wo).transpose(0, 2, 1)   # (B, N, E)
    mean = yf.mean(-1, keepdims=True)
    var = ((yf - mean) ** 2).mean(-1, keepdims=True)
    yn = (yf - mean) / jnp.sqrt(var + _LN_EPS)
    return yn * gamma.astype(jnp.float32) + beta.astype(jnp.float32), Ho, Wo


if __name__ == "__main__":
    def run_case(B, C, H, W, patch, stride, E, key):
        kx, kw_ = jax.random.split(key)
        x = jax.random.normal(kx, (B, C, H, W), dtype=jnp.float32)
        # Deterministic init mirroring the PyTorch module's _init_weights:
        fan_out = patch * patch * E
        w = jax.random.normal(kw_, (E, C, patch, patch),
                              dtype=jnp.float32) * math.sqrt(2.0 / fan_out)
        b = jnp.zeros((E,), dtype=jnp.float32)         # conv bias -> 0
        gamma = jnp.ones((E,), dtype=jnp.float32)      # LN weight -> 1
        beta = jnp.zeros((E,), dtype=jnp.float32)      # LN bias -> 0

        out, Ho, Wo = overlap_patch_embed(x, w, b, gamma, beta, stride=stride)
        out = jax.block_until_ready(out)

        ref, Ho_r, Wo_r = _reference(x, w, b, gamma, beta, stride=stride,
                                     matmul_dtype=jnp.bfloat16)
        assert (Ho, Wo) == (Ho_r, Wo_r)
        assert out.shape == (B, Ho * Wo, E)
        outf = out.astype(jnp.float32)
        # Precision-matched check (bf16 conv operands, f32 accumulation / LN;
        # tolerance covers the bf16 output quantization).
        assert jnp.allclose(outf, ref, atol=2e-2, rtol=2e-2), \
            "mismatch vs bf16 reference"
        # Loose sanity check against a full-f32 reference.
        ref32, _, _ = _reference(x, w, b, gamma, beta, stride=stride,
                                 matmul_dtype=jnp.float32)
        assert jnp.allclose(outf, ref32, atol=1e-1, rtol=1e-1), \
            "mismatch vs f32 reference"

    key = jax.random.PRNGKey(0)
    k1, k2 = jax.random.split(key)
    # Primary case: the module's default geometry at small shapes
    # (7x7 conv, stride 4, 4 input channels, 32 embed dims).
    run_case(B=2, C=4, H=16, W=16, patch=7, stride=4, E=32, key=k1)
    # Secondary case: later-PVT-stage geometry (3x3 conv, stride 2, E = 128).
    run_case(B=2, C=16, H=16, W=16, patch=3, stride=2, E=128, key=k2)

    print("KERNEL_OK")
</pallas_src>

<mosaic_0001>
module attributes {stable_mosaic.version = 11 : i64} {
  func.func @kernel(%arg0: i32, %arg1: memref<1x5x6x64xbf16, #tpu.memory_space<vmem>>, %arg2: memref<4x64x128xbf16, #tpu.memory_space<vmem>>, %arg3: memref<1x128xf32, #tpu.memory_space<vmem>>, %arg4: memref<1x128xf32, #tpu.memory_space<vmem>>, %arg5: memref<1x128xf32, #tpu.memory_space<vmem>>, %arg6: memref<1x128xf32, #tpu.memory_space<vmem>>, %arg7: memref<1x16x128xbf16, #tpu.memory_space<vmem>>) attributes {dimension_semantics = [#tpu.dimension_semantics<parallel>], iteration_bounds = array<i64: 2>, scalar_prefetch = 0 : i64, scratch_operands = 0 : i64, tpu.core_type = #tpu.core_type<tc>, window_params = [{transform_indices = @transform_0, window_bounds = array<i64: 1, 5, 6, 64>}, {pipeline_mode = #tpu.pipeline_mode<synchronous>, transform_indices = @transform_1, window_bounds = array<i64: 4, 64, 128>}, {pipeline_mode = #tpu.pipeline_mode<synchronous>, transform_indices = @transform_2, window_bounds = array<i64: 1, 128>}, {pipeline_mode = #tpu.pipeline_mode<synchronous>, transform_indices = @transform_3, window_bounds = array<i64: 1, 128>}, {pipeline_mode = #tpu.pipeline_mode<synchronous>, transform_indices = @transform_4, window_bounds = array<i64: 1, 128>}, {pipeline_mode = #tpu.pipeline_mode<synchronous>, transform_indices = @transform_5, window_bounds = array<i64: 1, 128>}, {transform_indices = @transform_6, window_bounds = array<i64: 1, 16, 128>}]} {
    %c0 = arith.constant 0 : index
    %c0_0 = arith.constant 0 : index
    %c0_1 = arith.constant 0 : index
    %c0_2 = arith.constant 0 : index
    %0 = vector.load %arg1[%c0, %c0_0, %c0_1, %c0_2] : memref<1x5x6x64xbf16, #tpu.memory_space<vmem>>, vector<1x4x4x64xbf16>
    %1 = vector.shape_cast %0 : vector<1x4x4x64xbf16> to vector<4x4x64xbf16>
    %2 = vector.shape_cast %1 : vector<4x4x64xbf16> to vector<16x64xbf16>
    %c0_3 = arith.constant 0 : index
    %c0_4 = arith.constant 0 : index
    %c0_5 = arith.constant 0 : index
    %3 = vector.load %arg2[%c0_3, %c0_4, %c0_5] : memref<4x64x128xbf16, #tpu.memory_space<vmem>>, vector<1x64x128xbf16>
    %4 = vector.shape_cast %3 : vector<1x64x128xbf16> to vector<64x128xbf16>
    %cst = arith.constant dense<0.000000e+00> : vector<16x128xf32>
    %5 = tpu.matmul %2, %4, %cst {dimension_numbers = #tpu.dot_dimension_numbers<[1], [0], [0], [1], [0, 0, 1, 1], [], []>} : vector<16x64xbf16>, vector<64x128xbf16>, vector<16x128xf32> -> vector<16x128xf32>
    %c0_6 = arith.constant 0 : index
    %c0_7 = arith.constant 0 : index
    %c1 = arith.constant 1 : index
    %c0_8 = arith.constant 0 : index
    %6 = vector.load %arg1[%c0_6, %c0_7, %c1, %c0_8] : memref<1x5x6x64xbf16, #tpu.memory_space<vmem>>, vector<1x4x4x64xbf16>
    %7 = vector.shape_cast %6 : vector<1x4x4x64xbf16> to vector<4x4x64xbf16>
    %8 = vector.shape_cast %7 : vector<4x4x64xbf16> to vector<16x64xbf16>
    %c1_9 = arith.constant 1 : index
    %c0_10 = arith.constant 0 : index
    %c0_11 = arith.constant 0 : index
    %9 = vector.load %arg2[%c1_9, %c0_10, %c0_11] : memref<4x64x128xbf16, #tpu.memory_space<vmem>>, vector<1x64x128xbf16>
    %10 = vector.shape_cast %9 : vector<1x64x128xbf16> to vector<64x128xbf16>
    %cst_12 = arith.constant dense<0.000000e+00> : vector<16x128xf32>
    %11 = tpu.matmul %8, %10, %cst_12 {dimension_numbers = #tpu.dot_dimension_numbers<[1], [0], [0], [1], [0, 0, 1, 1], [], []>} : vector<16x64xbf16>, vector<64x128xbf16>, vector<16x128xf32> -> vector<16x128xf32>
    %12 = arith.addf %5, %11 : vector<16x128xf32>
    %c0_13 = arith.constant 0 : index
    %c1_14 = arith.constant 1 : index
    %c0_15 = arith.constant 0 : index
    %c0_16 = arith.constant 0 : index
    %13 = vector.load %arg1[%c0_13, %c1_14, %c0_15, %c0_16] : memref<1x5x6x64xbf16, #tpu.memory_space<vmem>>, vector<1x4x4x64xbf16>
    %14 = vector.shape_cast %13 : vector<1x4x4x64xbf16> to vector<4x4x64xbf16>
    %15 = vector.shape_cast %14 : vector<4x4x64xbf16> to vector<16x64xbf16>
    %c2 = arith.constant 2 : index
    %c0_17 = arith.constant 0 : index
    %c0_18 = arith.constant 0 : index
    %16 = vector.load %arg2[%c2, %c0_17, %c0_18] : memref<4x64x128xbf16, #tpu.memory_space<vmem>>, vector<1x64x128xbf16>
    %17 = vector.shape_cast %16 : vector<1x64x128xbf16> to vector<64x128xbf16>
    %cst_19 = arith.constant dense<0.000000e+00> : vector<16x128xf32>
    %18 = tpu.matmul %15, %17, %cst_19 {dimension_numbers = #tpu.dot_dimension_numbers<[1], [0], [0], [1], [0, 0, 1, 1], [], []>} : vector<16x64xbf16>, vector<64x128xbf16>, vector<16x128xf32> -> vector<16x128xf32>
    %19 = arith.addf %12, %18 : vector<16x128xf32>
    %c0_20 = arith.constant 0 : index
    %c1_21 = arith.constant 1 : index
    %c1_22 = arith.constant 1 : index
    %c0_23 = arith.constant 0 : index
    %20 = vector.load %arg1[%c0_20, %c1_21, %c1_22, %c0_23] : memref<1x5x6x64xbf16, #tpu.memory_space<vmem>>, vector<1x4x4x64xbf16>
    %21 = vector.shape_cast %20 : vector<1x4x4x64xbf16> to vector<4x4x64xbf16>
    %22 = vector.shape_cast %21 : vector<4x4x64xbf16> to vector<16x64xbf16>
    %c3 = arith.constant 3 : index
    %c0_24 = arith.constant 0 : index
    %c0_25 = arith.constant 0 : index
    %23 = vector.load %arg2[%c3, %c0_24, %c0_25] : memref<4x64x128xbf16, #tpu.memory_space<vmem>>, vector<1x64x128xbf16>
    %24 = vector.shape_cast %23 : vector<1x64x128xbf16> to vector<64x128xbf16>
    %cst_26 = arith.constant dense<0.000000e+00> : vector<16x128xf32>
    %25 = tpu.matmul %22, %24, %cst_26 {dimension_numbers = #tpu.dot_dimension_numbers<[1], [0], [0], [1], [0, 0, 1, 1], [], []>} : vector<16x64xbf16>, vector<64x128xbf16>, vector<16x128xf32> -> vector<16x128xf32>
    %26 = arith.addf %19, %25 : vector<16x128xf32>
    %c0_27 = arith.constant 0 : index
    %c0_28 = arith.constant 0 : index
    %27 = vector.load %arg3[%c0_27, %c0_28] : memref<1x128xf32, #tpu.memory_space<vmem>>, vector<1x128xf32>
    %28 = vector.broadcast %27 : vector<1x128xf32> to vector<16x128xf32>
    %29 = arith.addf %26, %28 : vector<16x128xf32>
    %cst_29 = arith.constant dense<0.000000e+00> : vector<16xf32>
    %30 = vector.multi_reduction <add>, %29, %cst_29 [1] : vector<16x128xf32> to vector<16xf32>
    %31 = vector.shape_cast %30 : vector<16xf32> to vector<16x1xf32>
    %cst_30 = arith.constant 3.125000e-02 : f32
    %32 = vector.broadcast %cst_30 : f32 to vector<16x1xf32>
    %33 = arith.mulf %31, %32 : vector<16x1xf32>
    %34 = vector.broadcast %33 : vector<16x1xf32> to vector<16x128xf32>
    %35 = arith.subf %29, %34 : vector<16x128xf32>
    %36 = arith.mulf %35, %35 : vector<16x128xf32>
    %c0_31 = arith.constant 0 : index
    %c0_32 = arith.constant 0 : index
    %37 = vector.load %arg6[%c0_31, %c0_32] : memref<1x128xf32, #tpu.memory_space<vmem>>, vector<1x128xf32>
    %38 = vector.broadcast %37 : vector<1x128xf32> to vector<16x128xf32>
    %39 = arith.mulf %36, %38 : vector<16x128xf32>
    %cst_33 = arith.constant dense<0.000000e+00> : vector<16xf32>
    %40 = vector.multi_reduction <add>, %39, %cst_33 [1] : vector<16x128xf32> to vector<16xf32>
    %41 = vector.shape_cast %40 : vector<16xf32> to vector<16x1xf32>
    %cst_34 = arith.constant 3.125000e-02 : f32
    %42 = vector.broadcast %cst_34 : f32 to vector<16x1xf32>
    %43 = arith.mulf %41, %42 : vector<16x1xf32>
    %cst_35 = arith.constant 9.99999974E-6 : f32
    %44 = vector.broadcast %cst_35 : f32 to vector<16x1xf32>
    %45 = arith.addf %43, %44 : vector<16x1xf32>
    %46 = math.rsqrt %45 : vector<16x1xf32>
    %47 = vector.broadcast %46 : vector<16x1xf32> to vector<16x128xf32>
    %48 = arith.mulf %35, %47 : vector<16x128xf32>
    %c0_36 = arith.constant 0 : index
    %c0_37 = arith.constant 0 : index
    %49 = vector.load %arg4[%c0_36, %c0_37] : memref<1x128xf32, #tpu.memory_space<vmem>>, vector<1x128xf32>
    %50 = vector.broadcast %49 : vector<1x128xf32> to vector<16x128xf32>
    %51 = arith.mulf %48, %50 : vector<16x128xf32>
    %c0_38 = arith.constant 0 : index
    %c0_39 = arith.constant 0 : index
    %52 = vector.load %arg5[%c0_38, %c0_39] : memref<1x128xf32, #tpu.memory_space<vmem>>, vector<1x128xf32>
    %53 = vector.broadcast %52 : vector<1x128xf32> to vector<16x128xf32>
    %54 = arith.addf %51, %53 : vector<16x128xf32>
    %55 = arith.truncf %54 : vector<16x128xf32> to vector<16x128xbf16>
    %c0_40 = arith.constant 0 : index
    %c0_41 = arith.constant 0 : index
    %c0_42 = arith.constant 0 : index
    %56 = vector.load %arg7[%c0_40, %c0_41, %c0_42] : memref<1x16x128xbf16, #tpu.memory_space<vmem>>, vector<1x16x128xbf16>
    %57 = vector.shape_cast %56 : vector<1x16x128xbf16> to vector<16x128xbf16>
    %58 = vector.shape_cast %55 : vector<16x128xbf16> to vector<1x16x128xbf16>
    tpu.vector_store %arg7[%c0_40, %c0_41, %c0_42], %58 {strides = array<i32>} : memref<1x16x128xbf16, #tpu.memory_space<vmem>>, vector<1x16x128xbf16>,
    return
  }
  func.func @transform_0(%arg0: i32) -> (i32, i32, i32, i32) {
    %c0_i32 = arith.constant 0 : i32
    %c0_i32_0 = arith.constant 0 : i32
    %c0_i32_1 = arith.constant 0 : i32
    %c0_i32_2 = arith.constant 0 : i32
    return %arg0, %c0_i32, %c0_i32_0, %c0_i32_1 : i32, i32, i32, i32
  }
  func.func @transform_1(%arg0: i32) -> (i32, i32, i32) {
    %c0_i32 = arith.constant 0 : i32
    %c0_i32_0 = arith.constant 0 : i32
    %c0_i32_1 = arith.constant 0 : i32
    %c0_i32_2 = arith.constant 0 : i32
    return %c0_i32, %c0_i32_0, %c0_i32_1 : i32, i32, i32
  }
  func.func @transform_2(%arg0: i32) -> (i32, i32) {
    %c0_i32 = arith.constant 0 : i32
    %c0_i32_0 = arith.constant 0 : i32
    %c0_i32_1 = arith.constant 0 : i32
    return %c0_i32, %c0_i32_0 : i32, i32
  }
  func.func @transform_3(%arg0: i32) -> (i32, i32) {
    %c0_i32 = arith.constant 0 : i32
    %c0_i32_0 = arith.constant 0 : i32
    %c0_i32_1 = arith.constant 0 : i32
    return %c0_i32, %c0_i32_0 : i32, i32
  }
  func.func @transform_4(%arg0: i32) -> (i32, i32) {
    %c0_i32 = arith.constant 0 : i32
    %c0_i32_0 = arith.constant 0 : i32
    %c0_i32_1 = arith.constant 0 : i32
    return %c0_i32, %c0_i32_0 : i32, i32
  }
  func.func @transform_5(%arg0: i32) -> (i32, i32) {
    %c0_i32 = arith.constant 0 : i32
    %c0_i32_0 = arith.constant 0 : i32
    %c0_i32_1 = arith.constant 0 : i32
    return %c0_i32, %c0_i32_0 : i32, i32
  }
  func.func @transform_6(%arg0: i32) -> (i32, i32, i32) {
    %c0_i32 = arith.constant 0 : i32
    %c0_i32_0 = arith.constant 0 : i32
    %c0_i32_1 = arith.constant 0 : i32
    return %arg0, %c0_i32, %c0_i32_0 : i32, i32, i32
  }
}

</mosaic_0001>

<llo_original>
// kernel: tpu_custom_call.1
$region0: #{tpu_custom_call.1}
  #allocation0 [shape = 'u32[]', space=smem, size = 0x4, offset = 0x4, fixed_abs, tag = 'smem constant byte address 0x4 - core index']
  #allocation1 [shape = 'u32[144,128]{1,0:T(1,128)}', space=vmem, size = 0x12000, scoped, tag = 'internal scratch']
  %s0 = inlined_call_operand.vmem [shape: bf16[2,5,6,64], index: 0, kind: input, shape index: {}]
  %s1 = inlined_call_operand.hbm [shape: bf16[4,64,128], index: 1, kind: input, shape index: {}]
  %s2 = inlined_call_operand.vmem [shape: f32[1,128], index: 2, kind: input, shape index: {}]
  %s3 = inlined_call_operand.vmem [shape: f32[1,128], index: 3, kind: input, shape index: {}]
  %s4 = inlined_call_operand.vmem [shape: f32[1,128], index: 4, kind: input, shape index: {}]
  %s5 = inlined_call_operand.vmem [shape: f32[1,128], index: 5, kind: input, shape index: {}]
  %s6 = inlined_call_operand.hbm [shape: bf16[2,16,128], index: 6, kind: output, shape index: {}]
  %s7 = sld [smem:[#allocation0]]
  $region61: #{tpu_custom_call.1} parent=0
    _
  %s9 = ssub.s32 1, %s7
  %s10 = scalar_select 0, %s9, %s7
  $region1: #{tpu_custom_call.1} parent=0
    #allocation2 [shape = 'u8[65536]{0}', space=vmem, size = 0x10000, scoped, tag = 'input window, operand 1, single buffered']
    #allocation3 [shape = 's32[2]{0}', space=sflag, size = 0x8, scoped, tag = 'scoped memory for tpu_custom_call.1']
    #allocation4 [shape = 's32[2]{0}', space=sflag, size = 0x8, scoped, tag = 'scoped memory for tpu_custom_call.1']
    #allocation5 [shape = 'u8[8192]{0}', space=vmem, size = 0x2000, scoped, tag = 'output window, operand 0']
    %11 = vsyncpa [#allocation3], 0
    %12 = vsyncpa [#allocation4], 0
    %s13 = scalar_lea.sflag [#allocation4], 1
    %14 = vsyncpa %s13, 0
    loop: start=0, step=1, limit=4
    $region2: #{tpu_custom_call.1} parent=1 // loop_pre_header
      _
    $region3: #{tpu_custom_call.1} parent=1 // loop_header
      %s16 = sphi 0, %s20
      %p17 = scmp.ge.s32.totalorder %s16, 4
      %s26 = sphi 0, %s28
      %s29 = sphi 0, %s26
      %s30 = sphi 0, %s29
      %s46 = sphi 0, %s30
      %s50 = sphi 0, %s50
      %s52 = sphi 0, %s50
      %s53 = sphi 0, %s52
      %s67 = sphi 0, %s53
      %s71 = sphi 0, %s71
      %s73 = sphi 0, %s71
      %s74 = sphi 0, %s73
      %s88 = sphi 0, %s74
      %s92 = sphi 0, %s92
      %s94 = sphi 0, %s92
      %s95 = sphi 0, %s94
      %s109 = sphi 0, %s95
      %s113 = sphi 0, %s113
      %s115 = sphi 0, %s113
      %s116 = sphi 0, %s115
      %s130 = sphi 0, %s116
      %s134 = sphi 0, %s134
      %s136 = sphi 0, %s134
      %s137 = sphi 0, %s136
      %s151 = sphi 0, %s137
      %s157 = sphi 0, %s159
      %s160 = sphi 0, %s157
      %s161 = sphi 0, %s160
      %s177 = sphi 0, %s161
    $region4: #{tpu_custom_call.1} parent=1 // loop_header_branch
      %19 = sbr.rel (%p17) target = $region8
    $region5: #{tpu_custom_call.1} parent=1 // loop_body
      %s21 = ssub.s32 %s16, 1
      %s22 = ssub.s32 %s16, 2
      %s23 = sadd.s32 %s16, 1
      %s24 = ssub.s32 %s16, %s23
      %p25 = scmp.eq.s32.totalorder %s24, 0
      %s27 = sadd.s32 %s26, 1
      %s28 = scalar_select %p25, %s26, %s27
      %p31 = pneg %p25
      %p32 = scmp.eq.s32.totalorder %s16, 1
      %p33 = por %p31, %p32
      %p34 = scmp.ne.s32.totalorder %s26, %s29
      %p35 = scmp.eq.s32.totalorder %s16, 0
      %p36 = por %p34, %p35
      %p37 = scmp.ne.s32.totalorder %s26, %s29
      %p38 = scmp.eq.s32.totalorder %s21, 1
      %p39 = por %p37, %p38
      %p40 = scmp.ne.s32.totalorder %s29, %s30
      %p41 = scmp.eq.s32.totalorder %s21, 0
      %p42 = por %p40, %p41
      %p43 = scmp.ne.s32.totalorder %s29, %s30
      %p44 = scmp.eq.s32.totalorder %s22, 1
      %p45 = por %p43, %p44
      %p47 = scmp.ne.s32.totalorder %s30, %s46
      %p48 = scmp.eq.s32.totalorder %s22, 0
      %p49 = por %p47, %p48
      %s51 = sadd.s32 %s50, 1
      %p54 = scmp.eq.s32.totalorder %s16, 1
      %p55 = scmp.ne.s32.totalorder %s50, %s52
      %p56 = scmp.eq.s32.totalorder %s16, 0
      %p57 = por %p55, %p56
      %p58 = scmp.ne.s32.totalorder %s50, %s52
      %p59 = scmp.eq.s32.totalorder %s21, 1
      %p60 = por %p58, %p59
      %p61 = scmp.ne.s32.totalorder %s52, %s53
      %p62 = scmp.eq.s32.totalorder %s21, 0
      %p63 = por %p61, %p62
      %p64 = scmp.ne.s32.totalorder %s52, %s53
      %p65 = scmp.eq.s32.totalorder %s22, 1
      %p66 = por %p64, %p65
      %p68 = scmp.ne.s32.totalorder %s53, %s67
      %p69 = scmp.eq.s32.totalorder %s22, 0
      %p70 = por %p68, %p69
      %s72 = sadd.s32 %s71, 1
      %p75 = scmp.eq.s32.totalorder %s16, 1
      %p76 = scmp.ne.s32.totalorder %s71, %s73
      %p77 = scmp.eq.s32.totalorder %s16, 0
      %p78 = por %p76, %p77
      %p79 = scmp.ne.s32.totalorder %s71, %s73
      %p80 = scmp.eq.s32.totalorder %s21, 1
      %p81 = por %p79, %p80
      %p82 = scmp.ne.s32.totalorder %s73, %s74
      %p83 = scmp.eq.s32.totalorder %s21, 0
      %p84 = por %p82, %p83
      %p85 = scmp.ne.s32.totalorder %s73, %s74
      %p86 = scmp.eq.s32.totalorder %s22, 1
      %p87 = por %p85, %p86
      %p89 = scmp.ne.s32.totalorder %s74, %s88
      %p90 = scmp.eq.s32.totalorder %s22, 0
      %p91 = por %p89, %p90
      %s93 = sadd.s32 %s92, 1
      %p96 = scmp.eq.s32.totalorder %s16, 1
      %p97 = scmp.ne.s32.totalorder %s92, %s94
      %p98 = scmp.eq.s32.totalorder %s16, 0
      %p99 = por %p97, %p98
      %p100 = scmp.ne.s32.totalorder %s92, %s94
      %p101 = scmp.eq.s32.totalorder %s21, 1
      %p102 = por %p100, %p101
      %p103 = scmp.ne.s32.totalorder %s94, %s95
      %p104 = scmp.eq.s32.totalorder %s21, 0
      %p105 = por %p103, %p104
      %p106 = scmp.ne.s32.totalorder %s94, %s95
      %p107 = scmp.eq.s32.totalorder %s22, 1
      %p108 = por %p106, %p107
      %p110 = scmp.ne.s32.totalorder %s95, %s109
      %p111 = scmp.eq.s32.totalorder %s22, 0
      %p112 = por %p110, %p111
      %s114 = sadd.s32 %s113, 1
      %p117 = scmp.eq.s32.totalorder %s16, 1
      %p118 = scmp.ne.s32.totalorder %s113, %s115
      %p119 = scmp.eq.s32.totalorder %s16, 0
      %p120 = por %p118, %p119
      %p121 = scmp.ne.s32.totalorder %s113, %s115
      %p122 = scmp.eq.s32.totalorder %s21, 1
      %p123 = por %p121, %p122
      %p124 = scmp.ne.s32.totalorder %s115, %s116
      %p125 = scmp.eq.s32.totalorder %s21, 0
      %p126 = por %p124, %p125
      %p127 = scmp.ne.s32.totalorder %s115, %s116
      %p128 = scmp.eq.s32.totalorder %s22, 1
      %p129 = por %p127, %p128
      %p131 = scmp.ne.s32.totalorder %s116, %s130
      %p132 = scmp.eq.s32.totalorder %s22, 0
      %p133 = por %p131, %p132
      %s135 = sadd.s32 %s134, 1
      %p138 = scmp.eq.s32.totalorder %s16, 1
      %p139 = scmp.ne.s32.totalorder %s134, %s136
      %p140 = scmp.eq.s32.totalorder %s16, 0
      %p141 = por %p139, %p140
      %p142 = scmp.ne.s32.totalorder %s134, %s136
      %p143 = scmp.eq.s32.totalorder %s21, 1
      %p144 = por %p142, %p143
      %p145 = scmp.ne.s32.totalorder %s136, %s137
      %p146 = scmp.eq.s32.totalorder %s21, 0
      %p147 = por %p145, %p146
      %p148 = scmp.ne.s32.totalorder %s136, %s137
      %p149 = scmp.eq.s32.totalorder %s22, 1
      %p150 = por %p148, %p149
      %p152 = scmp.ne.s32.totalorder %s137, %s151
      %p153 = scmp.eq.s32.totalorder %s22, 0
      %p154 = por %p152, %p153
      %s155 = ssub.s32 %s16, %s23
      %p156 = scmp.eq.s32.totalorder %s155, 0
      %s158 = sadd.s32 %s157, 1
      %s159 = scalar_select %p156, %s157, %s158
      %p162 = pneg %p156
      %p163 = scmp.eq.s32.totalorder %s16, 1
      %p164 = por %p162, %p163
      %p165 = scmp.ne.s32.totalorder %s157, %s160
      %p166 = scmp.eq.s32.totalorder %s16, 0
      %p167 = por %p165, %p166
      %p168 = scmp.ne.s32.totalorder %s157, %s160
      %p169 = scmp.eq.s32.totalorder %s21, 1
      %p170 = por %p168, %p169
      %p171 = scmp.ne.s32.totalorder %s160, %s161
      %p172 = scmp.eq.s32.totalorder %s21, 0
      %p173 = por %p171, %p172
      %p174 = scmp.ne.s32.totalorder %s160, %s161
      %p175 = scmp.eq.s32.totalorder %s22, 1
      %p176 = por %p174, %p175
      %p178 = scmp.ne.s32.totalorder %s161, %s177
      %p179 = scmp.eq.s32.totalorder %s22, 0
      %p180 = por %p178, %p179
      %p181 = scmp.le.s32.totalorder 1, %s16
      %p182 = scmp.lt.s32.totalorder %s16, 3
      %p183 = pnand %p181, %p182
      %p184 = pneg %p183
      // Predicated region
      $region9: #{tpu_custom_call.1} parent=5 // pred_check
        _
      $region10: #{tpu_custom_call.1} parent=5 // pred_check_branch
        %186 = sbr.rel (%p183) target = $region12
      $region11: #{tpu_custom_call.1} parent=5 // pred_region
        %s187 = ssub.s32 %s16, 1
        // Predicated region
        $region13: #{tpu_custom_call.1} parent=11 // pred_check
          %p188 = pneg %p63
        $region14: #{tpu_custom_call.1} parent=11 // pred_check_branch
          %190 = sbr.rel (%p188) target = $region16
        $region15: #{tpu_custom_call.1} parent=11 // pred_region
          %s192 = ssub.s32 2048, 2048
          %193 = vsyncadd [#allocation3], %s192
          %s194 = sshll.u32 [#allocation2], 4
          %s195 = int_to_ptr.vmem [resolvable:$true] %s194
          %200 = dma.hbm_to_vmem [thread:$0]  %s1, 2048, %s195, [#allocation3], 64, 64, 4
        $region16: #{tpu_custom_call.1} parent=11 // pred_fallthru
          _
        // Predicated region
        $region17: #{tpu_custom_call.1} parent=11 // pred_check
          %p201 = pneg %p84
        $region18: #{tpu_custom_call.1} parent=11 // pred_check_branch
          %203 = sbr.rel (%p201) target = $region20
        $region19: #{tpu_custom_call.1} parent=11 // pred_region
          _
        $region20: #{tpu_custom_call.1} parent=11 // pred_fallthru
          _
        // Predicated region
        $region21: #{tpu_custom_call.1} parent=11 // pred_check
          %p204 = pneg %p105
        $region22: #{tpu_custom_call.1} parent=11 // pred_check_branch
          %206 = sbr.rel (%p204) target = $region24
        $region23: #{tpu_custom_call.1} parent=11 // pred_region
          _
        $region24: #{tpu_custom_call.1} parent=11 // pred_fallthru
          _
        // Predicated region
        $region25: #{tpu_custom_call.1} parent=11 // pred_check
          %p207 = pneg %p126
        $region26: #{tpu_custom_call.1} parent=11 // pred_check_branch
          %209 = sbr.rel (%p207) target = $region28
        $region27: #{tpu_custom_call.1} parent=11 // pred_region
          _
        $region28: #{tpu_custom_call.1} parent=11 // pred_fallthru
          _
        // Predicated region
        $region29: #{tpu_custom_call.1} parent=11 // pred_check
          %p210 = pneg %p147
        $region30: #{tpu_custom_call.1} parent=11 // pred_check_branch
          %212 = sbr.rel (%p210) target = $region32
        $region31: #{tpu_custom_call.1} parent=11 // pred_region
          _
        $region32: #{tpu_custom_call.1} parent=11 // pred_fallthru
          _
      $region12: #{tpu_custom_call.1} parent=5 // pred_fallthru
        _
      %p213 = scmp.lt.s32.totalorder %s16, 2
      // Predicated region
      $region33: #{tpu_custom_call.1} parent=5 // pred_check
        %p214 = pneg %p213
      $region34: #{tpu_custom_call.1} parent=5 // pred_check_branch
        %216 = sbr.rel (%p214) target = $region36
      $region35: #{tpu_custom_call.1} parent=5 // pred_region
        // Predicated region
        $region37: #{tpu_custom_call.1} parent=35 // pred_check
          %p217 = pneg %p36
        $region38: #{tpu_custom_call.1} parent=35 // pred_check_branch
          %219 = sbr.rel (%p217) target = $region40
        $region39: #{tpu_custom_call.1} parent=35 // pred_region
          %p220 = scmp.lt.s32.totalorder %s16, 1
          %s221 = scalar_select %p220, %s16, 1
          %s222 = smul.addr %s221, 5
          %s223 = smul.addr %s222, 4
          %s224 = scalar_lea.vmem %s0, %s223
        $region40: #{tpu_custom_call.1} parent=35 // pred_fallthru
          _
      $region36: #{tpu_custom_call.1} parent=5 // pred_fallthru
        _
      %p225 = scmp.le.s32.totalorder 1, %s16
      %p226 = scmp.lt.s32.totalorder %s16, 3
      %p227 = pnand %p225, %p226
      %p228 = pneg %p227
      // Predicated region
      $region41: #{tpu_custom_call.1} parent=5 // pred_check
        _
      $region42: #{tpu_custom_call.1} parent=5 // pred_check_branch
        %230 = sbr.rel (%p227) target = $region44
      $region43: #{tpu_custom_call.1} parent=5 // pred_region
        %s231 = ssub.s32 %s16, 1
        // Predicated region
        $region45: #{tpu_custom_call.1} parent=43 // pred_check
          %p232 = pneg %p63
        $region46: #{tpu_custom_call.1} parent=43 // pred_check_branch
          %234 = sbr.rel (%p232) target = $region48
        $region47: #{tpu_custom_call.1} parent=43 // pred_region
          %235 = dma.done [#allocation3], 2048
        $region48: #{tpu_custom_call.1} parent=43 // pred_fallthru
          _
        %p236 = scmp.lt.s32.totalorder %s21, 1
        %s237 = scalar_select %p236, %s21, 1
        %s238 = smul.addr %s237, 5
        %s239 = smul.addr %s238, 4
        %s240 = scalar_lea.vmem %s0, %s239
        %p241 = pneg %p42
        %p242 = pneg %p39
        %p243 = pneg %p63
        %p244 = pneg %p60
        %p245 = pneg %p84
        %p246 = pneg %p81
        %p247 = pneg %p105
        %p248 = pneg %p102
        %p249 = pneg %p126
        %p250 = pneg %p123
        %p251 = pneg %p147
        %p252 = pneg %p144
        %p253 = pneg %p173
        %p254 = pneg %p170
        %s255 = sand.u32 %s160, 1
        %s256 = scalar_lea.sflag [#allocation4], %s255
        %s257 = sand.u32 %s160, 1
        %s258 = smul.addr %s257, 8
        %s259 = scalar_lea.vmem [#allocation5], %s258
        %p260 = scmp.lt.s32.totalorder %s21, 1
        %s261 = scalar_select %p260, %s21, 1
        %s262 = smul.addr %s261, 5
        %s263 = smul.addr %s262, 4
        %s264 = scalar_lea.vmem %s0, %s263
        %v266 = vld [vmem:[%s264] sm:$0x3]
        %v267 = vld [vmem:[%s264 + $0x4] sm:$0x3]
        %v268 = vld [vmem:[%s264 + $0x8] sm:$0x3]
        %v269 = vld [vmem:[%s264 + $0xc] sm:$0x3]
        %v270 = vld [vmem:[#allocation2] sm:$0xf]
        %v271 = vld [vmem:[#allocation2 + $0x4] sm:$0xf]
        %v272 = vld [vmem:[#allocation2 + $0x8] sm:$0xf]
        %v273 = vld [vmem:[#allocation2 + $0xc] sm:$0xf]
        %v274 = vld [vmem:[#allocation2 + $0x10] sm:$0xf]
        %v275 = vld [vmem:[#allocation2 + $0x14] sm:$0xf]
        %v276 = vld [vmem:[#allocation2 + $0x18] sm:$0xf]
        %v277 = vld [vmem:[#allocation2 + $0x1c] sm:$0xf]
        %v278 = vld [vmem:[%s264] sm:$0x7]
        %v279 = vld [vmem:[%s264 + $0x4] sm:$0x7]
        %v280 = vld [vmem:[%s264 + $0x8] sm:$0x7]
        %v281 = vld [vmem:[%s264 + $0xc] sm:$0x7]
        %v287 = vunpack.c.l.s4 1983009808
        %v288 = vunpack.c.0.s8 %v287
        %v289 = vlaneseq
        %v290 = vshrl.u32 %v289, 7
        %v291 = vsub.s32 %v288, %v290
        %v292 = vrot.slane %v278, %v291
        %v293 = vcombine.high %v292, %v292
        %v295 = vunpack.c.l.s4 1983009808
        %v296 = vunpack.c.0.s8 %v295
        %v297 = vlaneseq
        %v298 = vshrl.u32 %v297, 7
        %v299 = vsub.s32 %v296, %v298
        %v300 = vrot.slane %v279, %v299
        %v301 = vcombine.high %v300, %v300
        %v303 = vunpack.c.l.s4 1983009808
        %v304 = vunpack.c.0.s8 %v303
        %v305 = vlaneseq
        %v306 = vshrl.u32 %v305, 7
        %v307 = vsub.s32 %v304, %v306
        %v308 = vrot.slane %v280, %v307
        %v309 = vcombine.high %v308, %v308
        %v311 = vunpack.c.l.s4 1983009808
        %v312 = vunpack.c.0.s8 %v311
        %v313 = vlaneseq
        %v314 = vshrl.u32 %v313, 7
        %v315 = vsub.s32 %v312, %v314
        %v316 = vrot.slane %v281, %v315
        %v317 = vcombine.high %v316, %v316
        %vm318 = vsmask.f32 1280
        %vm319 = vsmask.f32 3336
        %vm320 = vmor %vm318, %vm319
        %vm321 = vsmask.f32 5392
        %vm322 = vmor %vm320, %vm321
        %vm323 = vsmask.f32 7448
        %vm324 = vmor %vm322, %vm323
        %v326 = vshrl.u32 %v292, 16
        %v328 = vrot.slane %v326, 6
        %v329 = vshll.u32 %v292, 16
        %v331 = vrot.slane %v329, 7
        %v332 = vor.u32 %v328, %v331
        %v333 = vrot.slane %v332, 2
        %v335 = vshll.u32 %v293, 16
        %v337 = vrot.slane %v335, 7
        %v338 = vsel %vm324, %v333, %v337
        %v340 = vshrl.u32 %v300, 16
        %v342 = vrot.slane %v340, 6
        %v343 = vshll.u32 %v300, 16
        %v345 = vrot.slane %v343, 7
        %v346 = vor.u32 %v342, %v345
        %v347 = vrot.slane %v346, 2
        %v349 = vshll.u32 %v301, 16
        %v351 = vrot.slane %v349, 7
        %v352 = vsel %vm324, %v347, %v351
        %v354 = vshrl.u32 %v308, 16
        %v356 = vrot.slane %v354, 6
        %v357 = vshll.u32 %v308, 16
        %v359 = vrot.slane %v357, 7
        %v360 = vor.u32 %v356, %v359
        %v361 = vrot.slane %v360, 2
        %v363 = vshll.u32 %v309, 16
        %v365 = vrot.slane %v363, 7
        %v366 = vsel %vm324, %v361, %v365
        %v368 = vshrl.u32 %v316, 16
        %v370 = vrot.slane %v368, 6
        %v371 = vshll.u32 %v316, 16
        %v373 = vrot.slane %v371, 7
        %v374 = vor.u32 %v370, %v373
        %v375 = vrot.slane %v374, 2
        %v377 = vshll.u32 %v317, 16
        %v379 = vrot.slane %v377, 7
        %v380 = vsel %vm324, %v375, %v379
        %s381 = scalar_lea.vmem [#allocation2], 32
        %v382 = vld [vmem:[%s381] sm:$0xf]
        %v383 = vld [vmem:[%s381 + $0x4] sm:$0xf]
        %v384 = vld [vmem:[%s381 + $0x8] sm:$0xf]
        %v385 = vld [vmem:[%s381 + $0xc] sm:$0xf]
        %v386 = vld [vmem:[%s381 + $0x10] sm:$0xf]
        %v387 = vld [vmem:[%s381 + $0x14] sm:$0xf]
        %v388 = vld [vmem:[%s381 + $0x18] sm:$0xf]
        %v389 = vld [vmem:[%s381 + $0x1c] sm:$0xf]
        %v390 = vcombine.low %v338, %v352
        %v391 = vcombine.low %v366, %v380
        %v393 = vunpack.c.l.s4 1983009808
        %v394 = vunpack.c.0.s8 %v393
        %v395 = vlaneseq
        %v396 = vshrl.u32 %v395, 7
        %v397 = vsub.s32 %v394, %v396
        %v398 = vrot.slane %v390, %v397
        %v400 = vunpack.c.l.s4 1983009808
        %v401 = vunpack.c.0.s8 %v400
        %v402 = vlaneseq
        %v403 = vshrl.u32 %v402, 7
        %v404 = vsub.s32 %v401, %v403
        %v405 = vrot.slane %v391, %v404
        %v406 = vcombine.low %v398, %v405
        %v415 = vunpack.c.l.b16 %v382
        %v416 = vunpack.c.l.b16 %v383
        %v417 = vunpack.c.l.b16 %v384
        %v418 = vunpack.c.l.b16 %v385
        %v419 = vunpack.c.l.b16 %v386
        %v420 = vunpack.c.l.b16 %v387
        %v421 = vunpack.c.l.b16 %v388
        %v422 = vunpack.c.l.b16 %v389
        %v423 = vpack.c.b16 %v416, %v415
        %v424 = vpack.c.b16 %v418, %v417
        %v425 = vpack.c.b16 %v420, %v419
        %v426 = vpack.c.b16 %v422, %v421
        %vm431 = vcmask 523264
        %v433 = vsel %vm431, %v406, 0
        %435 = vmatprep.subr.bf16.mxu0 0
        %436 = vmatpush1.bf16.msra.mxu0 %v423
        %437 = vmatprep.subr.bf16.mxu0 0
        %438 = vmatpush1.bf16.msra.mxu0 %v424
        %439 = vmatprep.subr.bf16.mxu0 0
        %440 = vmatpush1.bf16.msra.mxu0 %v425
        %441 = vmatprep.subr.bf16.mxu0 0
        %442 = vmatpush1.bf16.msra.mxu0 %v426
        %443 = vmatprep.subr.bf16.mxu0 0
        %444 = vmatpush1.bf16.msra.mxu0 0
        %445 = vmatprep.subr.bf16.mxu0 0
        %446 = vmatpush1.bf16.msra.mxu0 0
        %447 = vmatprep.subr.bf16.mxu0 0
        %448 = vmatpush1.bf16.msra.mxu0 0
        %449 = vmatprep.subr.bf16.mxu0 0
        %450 = vmatpush1.bf16.msra.mxu0 0
        %451 = vmatprep.subr.bf16.mxu0 0
        %452 = vmatpush1.bf16.msra.mxu0 0
        %453 = vmatprep.subr.bf16.mxu0 0
        %454 = vmatpush1.bf16.msra.mxu0 0
        %455 = vmatprep.subr.bf16.mxu0 0
        %456 = vmatpush1.bf16.msra.mxu0 0
        %457 = vmatprep.subr.bf16.mxu0 0
        %458 = vmatpush1.bf16.msra.mxu0 0
        %459 = vmatprep.subr.bf16.mxu0 0
        %460 = vmatpush1.bf16.msra.mxu0 0
        %461 = vmatprep.subr.bf16.mxu0 0
        %462 = vmatpush1.bf16.msra.mxu0 0
        %463 = vmatprep.subr.bf16.mxu0 0
        %464 = vmatpush1.bf16.msra.mxu0 0
        %465 = vmatprep.subr.bf16.mxu0 0
        %466 = vmatpush1.bf16.msra.mxu0 0
        %467 = vmatprep.mubr.bf16.mxu0 0
        %468 = vmatmul.mubr.bf16.gmra.mrb[0].mxu0 %v433
        %v469 = vpop.f32.mrb[0].mxu0
        %v470 = vadd.f32 0.0, %v469
        %v471 = vpop.f32.mrb[0].mxu0
        %v472 = vpop.f32.mrb[0].mxu0
        %v473 = vadd.f32 0.0, %v472
        %v474 = vpop.f32.mrb[0].mxu0
        %475 = vdwg.mxu0
        %v480 = vcombine.low %v266, %v267
        %v481 = vcombine.low %v268, %v269
        %v483 = vunpack.c.l.s4 1983009808
        %v484 = vunpack.c.0.s8 %v483
        %v485 = vlaneseq
        %v486 = vshrl.u32 %v485, 7
        %v487 = vsub.s32 %v484, %v486
        %v488 = vrot.slane %v480, %v487
        %v490 = vunpack.c.l.s4 1983009808
        %v491 = vunpack.c.0.s8 %v490
        %v492 = vlaneseq
        %v493 = vshrl.u32 %v492, 7
        %v494 = vsub.s32 %v491, %v493
        %v495 = vrot.slane %v481, %v494
        %v496 = vcombine.low %v488, %v495
        %v505 = vunpack.c.l.b16 %v270
        %v506 = vunpack.c.l.b16 %v271
        %v507 = vunpack.c.l.b16 %v272
        %v508 = vunpack.c.l.b16 %v273
        %v509 = vunpack.c.l.b16 %v274
        %v510 = vunpack.c.l.b16 %v275
        %v511 = vunpack.c.l.b16 %v276
        %v512 = vunpack.c.l.b16 %v277
        %v513 = vpack.c.b16 %v506, %v505
        %v514 = vpack.c.b16 %v508, %v507
        %v515 = vpack.c.b16 %v510, %v509
        %v516 = vpack.c.b16 %v512, %v511
        %v522 = vsel %vm431, %v496, 0
        %524 = vmatprep.subr.bf16.mxu0 0
        %525 = vmatpush1.bf16.msra.mxu0 %v513
        %526 = vmatprep.subr.bf16.mxu0 0
        %527 = vmatpush1.bf16.msra.mxu0 %v514
        %528 = vmatprep.subr.bf16.mxu0 0
        %529 = vmatpush1.bf16.msra.mxu0 %v515
        %530 = vmatprep.subr.bf16.mxu0 0
        %531 = vmatpush1.bf16.msra.mxu0 %v516
        %532 = vmatprep.subr.bf16.mxu0 0
        %533 = vmatpush1.bf16.msra.mxu0 0
        %534 = vmatprep.subr.bf16.mxu0 0
        %535 = vmatpush1.bf16.msra.mxu0 0
        %536 = vmatprep.subr.bf16.mxu0 0
        %537 = vmatpush1.bf16.msra.mxu0 0
        %538 = vmatprep.subr.bf16.mxu0 0
        %539 = vmatpush1.bf16.msra.mxu0 0
        %540 = vmatprep.subr.bf16.mxu0 0
        %541 = vmatpush1.bf16.msra.mxu0 0
        %542 = vmatprep.subr.bf16.mxu0 0
        %543 = vmatpush1.bf16.msra.mxu0 0
        %544 = vmatprep.subr.bf16.mxu0 0
        %545 = vmatpush1.bf16.msra.mxu0 0
        %546 = vmatprep.subr.bf16.mxu0 0
        %547 = vmatpush1.bf16.msra.mxu0 0
        %548 = vmatprep.subr.bf16.mxu0 0
        %549 = vmatpush1.bf16.msra.mxu0 0
        %550 = vmatprep.subr.bf16.mxu0 0
        %551 = vmatpush1.bf16.msra.mxu0 0
        %552 = vmatprep.subr.bf16.mxu0 0
        %553 = vmatpush1.bf16.msra.mxu0 0
        %554 = vmatprep.subr.bf16.mxu0 0
        %555 = vmatpush1.bf16.msra.mxu0 0
        %556 = vmatprep.mubr.bf16.mxu0 0
        %557 = vmatmul.mubr.bf16.gmra.mrb[0].mxu0 %v522
        %v558 = vpop.f32.mrb[0].mxu0
        %v559 = vadd.f32 %v470, %v558
        %v560 = vpop.f32.mrb[0].mxu0
        %v561 = vpop.f32.mrb[0].mxu0
        %v562 = vadd.f32 %v473, %v561
        %v563 = vpop.f32.mrb[0].mxu0
        %564 = vdwg.mxu0
        %s565 = scalar_lea.vmem %s264, 4
        %v566 = vld [vmem:[%s565] sm:$0x3]
        %v567 = vld [vmem:[%s565 + $0x4] sm:$0x3]
        %v568 = vld [vmem:[%s565 + $0x8] sm:$0x3]
        %v569 = vld [vmem:[%s565 + $0xc] sm:$0x3]
        %s570 = scalar_lea.vmem [#allocation2], 64
        %v571 = vld [vmem:[%s570] sm:$0xf]
        %v572 = vld [vmem:[%s570 + $0x4] sm:$0xf]
        %v573 = vld [vmem:[%s570 + $0x8] sm:$0xf]
        %v574 = vld [vmem:[%s570 + $0xc] sm:$0xf]
        %v575 = vld [vmem:[%s570 + $0x10] sm:$0xf]
        %v576 = vld [vmem:[%s570 + $0x14] sm:$0xf]
        %v577 = vld [vmem:[%s570 + $0x18] sm:$0xf]
        %v578 = vld [vmem:[%s570 + $0x1c] sm:$0xf]
        %v583 = vcombine.low %v566, %v567
        %v584 = vcombine.low %v568, %v569
        %v586 = vunpack.c.l.s4 1983009808
        %v587 = vunpack.c.0.s8 %v586
        %v588 = vlaneseq
        %v589 = vshrl.u32 %v588, 7
        %v590 = vsub.s32 %v587, %v589
        %v591 = vrot.slane %v583, %v590
        %v593 = vunpack.c.l.s4 1983009808
        %v594 = vunpack.c.0.s8 %v593
        %v595 = vlaneseq
        %v596 = vshrl.u32 %v595, 7
        %v597 = vsub.s32 %v594, %v596
        %v598 = vrot.slane %v584, %v597
        %v599 = vcombine.low %v591, %v598
        %v608 = vunpack.c.l.b16 %v571
        %v609 = vunpack.c.l.b16 %v572
        %v610 = vunpack.c.l.b16 %v573
        %v611 = vunpack.c.l.b16 %v574
        %v612 = vunpack.c.l.b16 %v575
        %v613 = vunpack.c.l.b16 %v576
        %v614 = vunpack.c.l.b16 %v577
        %v615 = vunpack.c.l.b16 %v578
        %v616 = vpack.c.b16 %v609, %v608
        %v617 = vpack.c.b16 %v611, %v610
        %v618 = vpack.c.b16 %v613, %v612
        %v619 = vpack.c.b16 %v615, %v614
        %v625 = vsel %vm431, %v599, 0
        %627 = vmatprep.subr.bf16.mxu0 0
        %628 = vmatpush1.bf16.msra.mxu0 %v616
        %629 = vmatprep.subr.bf16.mxu0 0
        %630 = vmatpush1.bf16.msra.mxu0 %v617
        %631 = vmatprep.subr.bf16.mxu0 0
        %632 = vmatpush1.bf16.msra.mxu0 %v618
        %633 = vmatprep.subr.bf16.mxu0 0
        %634 = vmatpush1.bf16.msra.mxu0 %v619
        %635 = vmatprep.subr.bf16.mxu0 0
        %636 = vmatpush1.bf16.msra.mxu0 0
        %637 = vmatprep.subr.bf16.mxu0 0
        %638 = vmatpush1.bf16.msra.mxu0 0
        %639 = vmatprep.subr.bf16.mxu0 0
        %640 = vmatpush1.bf16.msra.mxu0 0
        %641 = vmatprep.subr.bf16.mxu0 0
        %642 = vmatpush1.bf16.msra.mxu0 0
        %643 = vmatprep.subr.bf16.mxu0 0
        %644 = vmatpush1.bf16.msra.mxu0 0
        %645 = vmatprep.subr.bf16.mxu0 0
        %646 = vmatpush1.bf16.msra.mxu0 0
        %647 = vmatprep.subr.bf16.mxu0 0
        %648 = vmatpush1.bf16.msra.mxu0 0
        %649 = vmatprep.subr.bf16.mxu0 0
        %650 = vmatpush1.bf16.msra.mxu0 0
        %651 = vmatprep.subr.bf16.mxu0 0
        %652 = vmatpush1.bf16.msra.mxu0 0
        %653 = vmatprep.subr.bf16.mxu0 0
        %654 = vmatpush1.bf16.msra.mxu0 0
        %655 = vmatprep.subr.bf16.mxu0 0
        %656 = vmatpush1.bf16.msra.mxu0 0
        %657 = vmatprep.subr.bf16.mxu0 0
        %658 = vmatpush1.bf16.msra.mxu0 0
        %659 = vmatprep.mubr.bf16.mxu0 0
        %660 = vmatmul.mubr.bf16.gmra.mrb[0].mxu0 %v625
        %v661 = vpop.f32.mrb[0].mxu0
        %v662 = vadd.f32 0.0, %v661
        %v663 = vpop.f32.mrb[0].mxu0
        %v664 = vpop.f32.mrb[0].mxu0
        %v665 = vadd.f32 0.0, %v664
        %v666 = vpop.f32.mrb[0].mxu0
        %667 = vdwg.mxu0
        %v668 = vadd.f32 %v559, %v662
        %v669 = vadd.f32 %v562, %v665
        %v670 = vld [vmem:[%s565] sm:$0x7]
        %v671 = vld [vmem:[%s565 + $0x4] sm:$0x7]
        %v672 = vld [vmem:[%s565 + $0x8] sm:$0x7]
        %v673 = vld [vmem:[%s565 + $0xc] sm:$0x7]
        %v679 = vunpack.c.l.s4 1983009808
        %v680 = vunpack.c.0.s8 %v679
        %v681 = vlaneseq
        %v682 = vshrl.u32 %v681, 7
        %v683 = vsub.s32 %v680, %v682
        %v684 = vrot.slane %v670, %v683
        %v685 = vcombine.high %v684, %v684
        %v687 = vunpack.c.l.s4 1983009808
        %v688 = vunpack.c.0.s8 %v687
        %v689 = vlaneseq
        %v690 = vshrl.u32 %v689, 7
        %v691 = vsub.s32 %v688, %v690
        %v692 = vrot.slane %v671, %v691
        %v693 = vcombine.high %v692, %v692
        %v695 = vunpack.c.l.s4 1983009808
        %v696 = vunpack.c.0.s8 %v695
        %v697 = vlaneseq
        %v698 = vshrl.u32 %v697, 7
        %v699 = vsub.s32 %v696, %v698
        %v700 = vrot.slane %v672, %v699
        %v701 = vcombine.high %v700, %v700
        %v703 = vunpack.c.l.s4 1983009808
        %v704 = vunpack.c.0.s8 %v703
        %v705 = vlaneseq
        %v706 = vshrl.u32 %v705, 7
        %v707 = vsub.s32 %v704, %v706
        %v708 = vrot.slane %v673, %v707
        %v709 = vcombine.high %v708, %v708
        %v711 = vshrl.u32 %v684, 16
        %v713 = vrot.slane %v711, 6
        %v714 = vshll.u32 %v684, 16
        %v716 = vrot.slane %v714, 7
        %v717 = vor.u32 %v713, %v716
        %v718 = vrot.slane %v717, 2
        %v720 = vshll.u32 %v685, 16
        %v722 = vrot.slane %v720, 7
        %v723 = vsel %vm324, %v718, %v722
        %v725 = vshrl.u32 %v692, 16
        %v727 = vrot.slane %v725, 6
        %v728 = vshll.u32 %v692, 16
        %v730 = vrot.slane %v728, 7
        %v731 = vor.u32 %v727, %v730
        %v732 = vrot.slane %v731, 2
        %v734 = vshll.u32 %v693, 16
        %v736 = vrot.slane %v734, 7
        %v737 = vsel %vm324, %v732, %v736
        %v739 = vshrl.u32 %v700, 16
        %v741 = vrot.slane %v739, 6
        %v742 = vshll.u32 %v700, 16
        %v744 = vrot.slane %v742, 7
        %v745 = vor.u32 %v741, %v744
        %v746 = vrot.slane %v745, 2
        %v748 = vshll.u32 %v701, 16
        %v750 = vrot.slane %v748, 7
        %v751 = vsel %vm324, %v746, %v750
        %v753 = vshrl.u32 %v708, 16
        %v755 = vrot.slane %v753, 6
        %v756 = vshll.u32 %v708, 16
        %v758 = vrot.slane %v756, 7
        %v759 = vor.u32 %v755, %v758
        %v760 = vrot.slane %v759, 2
        %v762 = vshll.u32 %v709, 16
        %v764 = vrot.slane %v762, 7
        %v765 = vsel %vm324, %v760, %v764
        %s766 = scalar_lea.vmem [#allocation2], 96
        %v767 = vld [vmem:[%s766] sm:$0xf]
        %v768 = vld [vmem:[%s766 + $0x4] sm:$0xf]
        %v769 = vld [vmem:[%s766 + $0x8] sm:$0xf]
        %v770 = vld [vmem:[%s766 + $0xc] sm:$0xf]
        %v771 = vld [vmem:[%s766 + $0x10] sm:$0xf]
        %v772 = vld [vmem:[%s766 + $0x14] sm:$0xf]
        %v773 = vld [vmem:[%s766 + $0x18] sm:$0xf]
        %v774 = vld [vmem:[%s766 + $0x1c] sm:$0xf]
        %v775 = vcombine.low %v723, %v737
        %v776 = vcombine.low %v751, %v765
        %v778 = vunpack.c.l.s4 1983009808
        %v779 = vunpack.c.0.s8 %v778
        %v780 = vlaneseq
        %v781 = vshrl.u32 %v780, 7
        %v782 = vsub.s32 %v779, %v781
        %v783 = vrot.slane %v775, %v782
        %v785 = vunpack.c.l.s4 1983009808
        %v786 = vunpack.c.0.s8 %v785
        %v787 = vlaneseq
        %v788 = vshrl.u32 %v787, 7
        %v789 = vsub.s32 %v786, %v788
        %v790 = vrot.slane %v776, %v789
        %v791 = vcombine.low %v783, %v790
        %v800 = vunpack.c.l.b16 %v767
        %v801 = vunpack.c.l.b16 %v768
        %v802 = vunpack.c.l.b16 %v769
        %v803 = vunpack.c.l.b16 %v770
        %v804 = vunpack.c.l.b16 %v771
        %v805 = vunpack.c.l.b16 %v772
        %v806 = vunpack.c.l.b16 %v773
        %v807 = vunpack.c.l.b16 %v774
        %v808 = vpack.c.b16 %v801, %v800
        %v809 = vpack.c.b16 %v803, %v802
        %v810 = vpack.c.b16 %v805, %v804
        %v811 = vpack.c.b16 %v807, %v806
        %v817 = vsel %vm431, %v791, 0
        %819 = vmatprep.subr.bf16.mxu0 0
        %820 = vmatpush1.bf16.msra.mxu0 %v808
        %821 = vmatprep.subr.bf16.mxu0 0
        %822 = vmatpush1.bf16.msra.mxu0 %v809
        %823 = vmatprep.subr.bf16.mxu0 0
        %824 = vmatpush1.bf16.msra.mxu0 %v810
        %825 = vmatprep.subr.bf16.mxu0 0
        %826 = vmatpush1.bf16.msra.mxu0 %v811
        %827 = vmatprep.subr.bf16.mxu0 0
        %828 = vmatpush1.bf16.msra.mxu0 0
        %829 = vmatprep.subr.bf16.mxu0 0
        %830 = vmatpush1.bf16.msra.mxu0 0
        %831 = vmatprep.subr.bf16.mxu0 0
        %832 = vmatpush1.bf16.msra.mxu0 0
        %833 = vmatprep.subr.bf16.mxu0 0
        %834 = vmatpush1.bf16.msra.mxu0 0
        %835 = vmatprep.subr.bf16.mxu0 0
        %836 = vmatpush1.bf16.msra.mxu0 0
        %837 = vmatprep.subr.bf16.mxu0 0
        %838 = vmatpush1.bf16.msra.mxu0 0
        %839 = vmatprep.subr.bf16.mxu0 0
        %840 = vmatpush1.bf16.msra.mxu0 0
        %841 = vmatprep.subr.bf16.mxu0 0
        %842 = vmatpush1.bf16.msra.mxu0 0
        %843 = vmatprep.subr.bf16.mxu0 0
        %844 = vmatpush1.bf16.msra.mxu0 0
        %845 = vmatprep.subr.bf16.mxu0 0
        %846 = vmatpush1.bf16.msra.mxu0 0
        %847 = vmatprep.subr.bf16.mxu0 0
        %848 = vmatpush1.bf16.msra.mxu0 0
        %849 = vmatprep.subr.bf16.mxu0 0
        %850 = vmatpush1.bf16.msra.mxu0 0
        %851 = vmatprep.mubr.bf16.mxu0 0
        %852 = vmatmul.mubr.bf16.gmra.mrb[0].mxu0 %v817
        %v853 = vpop.f32.mrb[0].mxu0
        %v854 = vadd.f32 0.0, %v853
        %v855 = vpop.f32.mrb[0].mxu0
        %v856 = vpop.f32.mrb[0].mxu0
        %v857 = vadd.f32 0.0, %v856
        %v858 = vpop.f32.mrb[0].mxu0
        %859 = vdwg.mxu0
        %v860 = vadd.f32 %v668, %v854
        %v861 = vadd.f32 %v669, %v857
        %v862 = vld [vmem:[%s2] sm:$0x1]
        %v864 = vlaneseq
        %v865 = vshrl.u32 %v864, 7
        %v866 = vsub.s32 0, %v865
        %v867 = vrot.slane %v862, %v866
        %v869 = vadd.f32 %v860, %v867
        %v870 = vadd.f32 %v861, %v867
        %871 = vadd.xlane.f32.xlu0 %v869
        %v872 = vpop.xlane.xlu0 %871
        %873 = vadd.xlane.f32.xlu0 %v870
        %v874 = vpop.xlane.xlu0 %873
        %v875 = vmul.f32 %v872, 0.03125
        %v876 = vmul.f32 %v874, 0.03125
        %v877 = vsub.f32 %v869, %v875
        %v878 = vsub.f32 %v870, %v876
        %v879 = vmul.f32 %v877, %v877
        %v880 = vmul.f32 %v878, %v878
        %v881 = vld [vmem:[%s5] sm:$0x1]
        %v883 = vlaneseq
        %v884 = vshrl.u32 %v883, 7
        %v885 = vsub.s32 0, %v884
        %v886 = vrot.slane %v881, %v885
        %v888 = vmul.f32 %v879, %v886
        %v889 = vmul.f32 %v880, %v886
        %890 = vadd.xlane.f32.xlu0 %v888
        %v891 = vpop.xlane.xlu0 %890
        %892 = vadd.xlane.f32.xlu0 %v889
        %v893 = vpop.xlane.xlu0 %892
        %v894 = vmul.f32 %v891, 0.03125
        %v895 = vmul.f32 %v893, 0.03125
        %v896 = vadd.f32 %v894, 1e-05
        %v897 = vadd.f32 %v895, 1e-05
        %v898 = vrsqrt.pop %v896
        %v899 = vrsqrt.pop %v897
        %v900 = vmul.f32 %v877, %v898
        %v901 = vmul.f32 %v878, %v899
        %v902 = vld [vmem:[%s3] sm:$0x1]
        %v904 = vlaneseq
        %v905 = vshrl.u32 %v904, 7
        %v906 = vsub.s32 0, %v905
        %v907 = vrot.slane %v902, %v906
        %v909 = vmul.f32 %v900, %v907
        %v910 = vmul.f32 %v901, %v907
        %v911 = vld [vmem:[%s4] sm:$0x1]
        %v913 = vlaneseq
        %v914 = vshrl.u32 %v913, 7
        %v915 = vsub.s32 0, %v914
        %v916 = vrot.slane %v911, %v915
        %v918 = vadd.f32 %v909, %v916
        %v919 = vadd.f32 %v910, %v916
        %v920 = vpack.c.bf16 %v919, %v918
        %v922 = vunpack.c.l.b16 %v920
        %v923 = vunpack.c.h.b16 %v920
        %v924 = vpack.c.b16 %v922, %v922
        %v925 = vpack.c.b16 %v923, %v923
        %928 = vst [vmem:[%s259] sm:$0xf] %v924
        %929 = vst [vmem:[%s259 + $0x4] sm:$0xf] %v925
        %s930 = sand.u32 %s160, 1
        %s931 = scalar_lea.sflag [#allocation4], %s930
        %s932 = sand.u32 %s160, 1
        %s933 = smul.addr %s932, 8
        %s934 = scalar_lea.vmem [#allocation5], %s933
        // Predicated region
        $region49: #{tpu_custom_call.1} parent=43 // pred_check
          %p935 = pneg %p170
        $region50: #{tpu_custom_call.1} parent=43 // pred_check_branch
          %937 = sbr.rel (%p935) target = $region52
        $region51: #{tpu_custom_call.1} parent=43 // pred_region
          %s939 = ssub.s32 128, 128
          %940 = vsyncadd %s931, %s939
          %s941 = smul.addr %s21, 2
          %s942 = smul.addr %s941, 64
          %s943 = scalar_lea.hbm %s6, %s942
          %s944 = sshll.u32 %s934, 4
          %s945 = int_to_ptr.vmem [resolvable:$true] %s944
          %950 = dma.vmem_to_hbm [thread:$0]  %s945, 128, %s943, %s931, 64, 64, 4
        $region52: #{tpu_custom_call.1} parent=43 // pred_fallthru
          _
      $region44: #{tpu_custom_call.1} parent=5 // pred_fallthru
        _
      %p951 = scmp.le.s32.totalorder 2, %s16
      // Predicated region
      $region53: #{tpu_custom_call.1} parent=5 // pred_check
        %p952 = pneg %p951
      $region54: #{tpu_custom_call.1} parent=5 // pred_check_branch
        %954 = sbr.rel (%p952) target = $region56
      $region55: #{tpu_custom_call.1} parent=5 // pred_region
        %s955 = ssub.s32 %s16, 2
        // Predicated region
        $region57: #{tpu_custom_call.1} parent=55 // pred_check
          %p956 = pneg %p176
        $region58: #{tpu_custom_call.1} parent=55 // pred_check_branch
          %958 = sbr.rel (%p956) target = $region60
        $region59: #{tpu_custom_call.1} parent=55 // pred_region
          %s959 = sand.u32 %s161, 1
          %s960 = scalar_lea.sflag [#allocation4], %s959
          %s961 = sand.u32 %s161, 1
          %s962 = smul.addr %s961, 8
          %s963 = scalar_lea.vmem [#allocation5], %s962
          %964 = dma.done %s960, 128
        $region60: #{tpu_custom_call.1} parent=55 // pred_fallthru
          _
      $region56: #{tpu_custom_call.1} parent=5 // pred_fallthru
        _
    $region6: #{tpu_custom_call.1} parent=1 // loop_footer
      %s20 = sadd.s32 1, %s16
    $region7: #{tpu_custom_call.1} parent=1 // loop_footer_branch
      %15 = sbr.rel target = $region3
    $region8: #{tpu_custom_call.1} parent=1 // loop_exit
      _
    %965 = vsyncpa [#allocation3], 1
    %s966 = scalar_lea.sflag [#allocation3], 1
    %967 = vsyncpa %s966, 1
    %968 = vsyncpa [#allocation4], 1
    %s969 = scalar_lea.sflag [#allocation4], 1
    %970 = vsyncpa %s969, 1

</llo_original>
